<compile_context>
chip_gen: v7x
topology: tpu7x:2x2x1
jax: 0.10.0
libtpu: 0.0.40
codegen_flags: <defaults>
</compile_context>

<pallas_src>
import math

import jax
import jax.numpy as jnp
from jax import lax
from jax.experimental import pallas as pl
from jax.experimental.pallas import tpu as pltpu

F32 = jnp.float32
BF16 = jnp.bfloat16


# ----------------------------------------------------------------------------
# small helpers
# ----------------------------------------------------------------------------
def _silu(y):
    return y * jax.nn.sigmoid(y)


def _gelu_exact(y):  # matches torch.nn.GELU() default (erf form)
    return 0.5 * y * (1.0 + lax.erf(y * (1.0 / math.sqrt(2.0))))


def _row_tile(m, cap=1024):
    """Row tile for (M, C) pointwise kernels; big tiles are cheaper (per-step
    overhead ~0.35us), cap at 1024 rows."""
    if m <= cap:
        return max(8, ((m + 7) // 8) * 8)
    return cap


def _pad_rows(x, mp):
    m = x.shape[0]
    return x if m == mp else jnp.pad(x, ((0, mp - m), (0, 0)))


def _vmem_limit(block_bytes, scratch_bytes=0):
    """Double-buffered pipeline blocks + scratch + headroom, capped below
    v7x's 64 MiB physical VMEM."""
    need = 2 * block_bytes + scratch_bytes + (8 << 20)
    return int(min(need, 56 << 20))


# ----------------------------------------------------------------------------
# Pallas kernels
# ----------------------------------------------------------------------------
def conv1x1_bn_silu(x, wgt_bf16, bias):
    """y = SiLU(x @ w + b) with BN pre-folded into (w, b).  Single lane-dense
    (tm, N) output (C2f's chunk(2) halves are indexed downstream)."""
    m, k = x.shape
    n = wgt_bf16.shape[1]
    tm = _row_tile(m)
    mp = pl.cdiv(m, tm) * tm
    xp = _pad_rows(x, mp)

    def kernel(x_ref, w_ref, b_ref, o_ref):
        y = jnp.dot(x_ref[...].astype(BF16), w_ref[...],
                    preferred_element_type=F32) + b_ref[...]
        o_ref[...] = _silu(y).astype(o_ref.dtype)

    out = pl.pallas_call(
        kernel,
        out_shape=jax.ShapeDtypeStruct((mp, n), BF16),
        grid=(mp // tm,),
        in_specs=[
            pl.BlockSpec((tm, k), lambda i: (i, 0)),
            pl.BlockSpec((k, n), lambda i: (0, 0)),
            pl.BlockSpec((1, n), lambda i: (0, 0)),
        ],
        out_specs=pl.BlockSpec((tm, n), lambda i: (i, 0)),
        compiler_params=pltpu.CompilerParams(dimension_semantics=("parallel",)),
    )(xp, wgt_bf16, bias.reshape(1, n))
    return out if mp == m else out[:m]


def conv3x3_bn_silu(x, wgt_bf16, bias):
    """3x3 'same' conv + folded BN + SiLU as 9 MXU matmuls.  The 1-pixel halo
    is built in a VMEM scratch (no HBM pad round-trip).  NHWC in, row-form
    (B*H*W, Cout) bf16 out.

    # TODO(synk): for large feature maps, tile H with a halo (manual DMA) so a
    # whole image never has to sit in VMEM and both v7x TCs get >=4 grid steps.
    """
    B, H, W, Cin = x.shape
    Cout = wgt_bf16.shape[-1]
    # TODO(synk): the in-kernel (H,W,C)->(H*W,C) reshape needs W % 8 == 0; pad W
    # in the wrapper for odd widths.
    assert W % 8 == 0, "conv3x3_bn_silu requires W % 8 == 0"
    hw = H * W
    pad = 1
    woff = 8 - pad                       # interior stored at sublane-aligned col 8
    sp_h, sp_w = H + 2 * pad, W + 16

    blk_bytes = (hw * Cin * 2 + 9 * Cin * Cout * 2 + Cout * 4 + hw * Cout * 2)
    scr_bytes = sp_h * sp_w * Cin * 2

    def kernel(x_ref, w_ref, b_ref, o_ref, pad_ref):
        # halo in VMEM: zero everything, then one aligned interior store.
        pad_ref[...] = jnp.zeros(pad_ref.shape, pad_ref.dtype)
        pad_ref[pl.ds(pad, H), pl.ds(8, W), :] = x_ref[0]
        acc = None
        for kh in range(3):
            for kw in range(3):
                patch = pad_ref[kh:kh + H, woff + kw:woff + kw + W, :]
                d = jnp.dot(patch.reshape(hw, Cin), w_ref[kh, kw],
                            preferred_element_type=F32)
                acc = d if acc is None else acc + d
        o_ref[...] = _silu(acc + b_ref[...]).astype(o_ref.dtype)

    return pl.pallas_call(
        kernel,
        out_shape=jax.ShapeDtypeStruct((B * hw, Cout), BF16),
        grid=(B,),
        in_specs=[
            pl.BlockSpec((1, H, W, Cin), lambda b: (b, 0, 0, 0)),
            pl.BlockSpec((3, 3, Cin, Cout), lambda b: (0, 0, 0, 0)),
            pl.BlockSpec((1, Cout), lambda b: (0, 0)),
        ],
        out_specs=pl.BlockSpec((hw, Cout), lambda b: (b, 0)),
        scratch_shapes=[pltpu.VMEM((sp_h, sp_w, Cin), x.dtype)],
        compiler_params=pltpu.CompilerParams(
            dimension_semantics=("parallel",),
            vmem_limit_bytes=_vmem_limit(blk_bytes, scr_bytes)),
    )(x, wgt_bf16, bias.reshape(1, Cout))


def convmod_front(x_rows, ln_g, ln_b, av_w_bf16, av_b, eps=1e-6):
    """Fused ConvMod front-end on (M, C) rows:
       xn = channels-first LayerNorm(x); [a|v] = xn @ [a_w|v_w] + [a_b|v_b]
       (single MXU push), a = GELU(a)."""
    m, c = x_rows.shape
    tm = _row_tile(m)
    mp = pl.cdiv(m, tm) * tm
    xp = _pad_rows(x_rows, mp)

    def kernel(x_ref, g_ref, be_ref, w_ref, b_ref, oa_ref, ov_ref):
        xb = x_ref[...].astype(F32)
        u = jnp.mean(xb, axis=-1, keepdims=True)
        d = xb - u
        s = jnp.mean(d * d, axis=-1, keepdims=True)
        xn = d * lax.rsqrt(s + eps) * g_ref[...] + be_ref[...]
        av = jnp.dot(xn.astype(BF16), w_ref[...],
                     preferred_element_type=F32) + b_ref[...]
        oa_ref[...] = _gelu_exact(av[:, :c]).astype(oa_ref.dtype)
        ov_ref[...] = av[:, c:].astype(ov_ref.dtype)

    a_pre, v = pl.pallas_call(
        kernel,
        out_shape=(jax.ShapeDtypeStruct((mp, c), BF16),
                   jax.ShapeDtypeStruct((mp, c), BF16)),
        grid=(mp // tm,),
        in_specs=[
            pl.BlockSpec((tm, c), lambda i: (i, 0)),
            pl.BlockSpec((1, c), lambda i: (0, 0)),
            pl.BlockSpec((1, c), lambda i: (0, 0)),
            pl.BlockSpec((c, 2 * c), lambda i: (0, 0)),
            pl.BlockSpec((1, 2 * c), lambda i: (0, 0)),
        ],
        out_specs=(pl.BlockSpec((tm, c), lambda i: (i, 0)),
                   pl.BlockSpec((tm, c), lambda i: (i, 0))),
        compiler_params=pltpu.CompilerParams(dimension_semantics=("parallel",)),
    )(xp, ln_g.reshape(1, c), ln_b.reshape(1, c), av_w_bf16, av_b.reshape(1, 2 * c))
    if mp != m:
        a_pre, v = a_pre[:m], v[:m]
    return a_pre, v


def dw_mul_proj(a_bhwc, v_rows, dw_w, dw_b, proj_w_bf16, proj_b):
    """11x11 depthwise conv (groups == channels, 'same') fused with the ConvMod
    tail: out = ((dw(a) + dw_b) * v) @ proj_w + proj_b.  Halo is built in a
    VMEM scratch; the depthwise loop reads one kh slab per iteration.

    # TODO(synk): gate the depthwise FMAs to bf16 on v6e/v7x (bf16 VALU) and
    # realign the per-kw windows with pltpu.roll; kept f32 + plain slices here
    # for v5e safety.
    # TODO(synk): tile H with a 5-pixel halo (manual DMA) for large feature maps.
    """
    B, H, W, C = a_bhwc.shape
    assert W % 8 == 0, "dw_mul_proj requires W % 8 == 0"
    ks = dw_w.shape[0]
    pad = ks // 2
    woff = 8 - pad
    hw = H * W
    sp_h, sp_w = H + 2 * pad, W + 16

    blk_bytes = (hw * C * 2 * 3 + ks * ks * C * 4 + C * 4 + C * C * 2 + C * 4)
    scr_bytes = sp_h * sp_w * C * 2

    def kernel(a_ref, v_ref, w_ref, b_ref, pw_ref, pb_ref, o_ref, pad_ref):
        pad_ref[...] = jnp.zeros(pad_ref.shape, pad_ref.dtype)
        pad_ref[pl.ds(pad, H), pl.ds(8, W), :] = a_ref[0]

        def kh_body(kh, acc):
            slab = pad_ref[pl.ds(kh, H), :, :].astype(F32)   # (H, sp_w, C)
            wrow = w_ref[kh]                                  # (ks, C) f32
            for kw in range(ks):
                acc = acc + slab[:, woff + kw:woff + kw + W, :] * wrow[kw]
            return acc

        acc = lax.fori_loop(0, ks, kh_body, jnp.zeros((H, W, C), F32))
        a = acc.reshape(hw, C) + b_ref[...]
        prod = a * v_ref[...].astype(F32)
        y = jnp.dot(prod.astype(BF16), pw_ref[...],
                    preferred_element_type=F32) + pb_ref[...]
        o_ref[...] = y.astype(o_ref.dtype)

    return pl.pallas_call(
        kernel,
        out_shape=jax.ShapeDtypeStruct((B * hw, C), BF16),
        grid=(B,),
        in_specs=[
            pl.BlockSpec((1, H, W, C), lambda b: (b, 0, 0, 0)),
            pl.BlockSpec((hw, C), lambda b: (b, 0)),
            pl.BlockSpec((ks, ks, C), lambda b: (0, 0, 0)),
            pl.BlockSpec((1, C), lambda b: (0, 0)),
            pl.BlockSpec((C, C), lambda b: (0, 0)),
            pl.BlockSpec((1, C), lambda b: (0, 0)),
        ],
        out_specs=pl.BlockSpec((hw, C), lambda b: (b, 0)),
        scratch_shapes=[pltpu.VMEM((sp_h, sp_w, C), a_bhwc.dtype)],
        compiler_params=pltpu.CompilerParams(
            dimension_semantics=("parallel",),
            vmem_limit_bytes=_vmem_limit(blk_bytes, scr_bytes)),
    )(a_bhwc, v_rows, dw_w, dw_b.reshape(1, C), proj_w_bf16, proj_b.reshape(1, C))


def concat_conv_silu(ys, ws_bf16, bias, out_dtype):
    """Final C2f cv2: SiLU(concat(ys, channel) @ W + b), computed as a fused
    sum of per-branch matmuls — the concatenated tensor never exists in HBM.
    Accumulator is initialized with the first branch's dot (no zeros pass)."""
    nb = len(ys)
    m = ys[0].shape[0]
    n = ws_bf16[0].shape[1]
    tm = _row_tile(m)
    mp = pl.cdiv(m, tm) * tm
    ys_p = [_pad_rows(y, mp) for y in ys]

    def kernel(*refs):
        y_refs = refs[:nb]
        w_refs = refs[nb:2 * nb]
        b_ref, o_ref = refs[2 * nb], refs[2 * nb + 1]
        acc = jnp.dot(y_refs[0][...], w_refs[0][...], preferred_element_type=F32)
        for j in range(1, nb):
            acc = acc + jnp.dot(y_refs[j][...], w_refs[j][...],
                                preferred_element_type=F32)
        o_ref[...] = _silu(acc + b_ref[...]).astype(o_ref.dtype)

    in_specs = (
        [pl.BlockSpec((tm, int(y.shape[1])), lambda i: (i, 0)) for y in ys_p]
        + [pl.BlockSpec(tuple(int(d) for d in w.shape), lambda i: (0, 0))
           for w in ws_bf16]
        + [pl.BlockSpec((1, n), lambda i: (0, 0))])

    out = pl.pallas_call(
        kernel,
        out_shape=jax.ShapeDtypeStruct((mp, n), out_dtype),
        grid=(mp // tm,),
        in_specs=in_specs,
        out_specs=pl.BlockSpec((tm, n), lambda i: (i, 0)),
        compiler_params=pltpu.CompilerParams(dimension_semantics=("parallel",)),
    )(*ys_p, *ws_bf16, bias.reshape(1, n))
    return out if mp == m else out[:m]


# ----------------------------------------------------------------------------
# module forward (thin JAX glue: transposes / free reshapes / tiny slices only)
# ----------------------------------------------------------------------------
def convmod(x_rows, B, H, W, blk):
    """ConvMod(dim): LN_cf -> fused [1x1 a | 1x1 v] (+GELU on a) -> 11x11 dw
    fused with (a*v) and the 1x1 proj."""
    C = x_rows.shape[-1]
    a_pre, v = convmod_front(x_rows, blk["ln_g"], blk["ln_b"],
                             blk["av_w"], blk["av_b"])
    return dw_mul_proj(a_pre.reshape(B, H, W, C), v,
                       blk["a2_w"], blk["a2_b"], blk["proj_w"], blk["proj_b"])


def c2f_convmod_forward(x_nchw, p):
    x = jnp.transpose(x_nchw, (0, 2, 3, 1))                  # NCHW -> NHWC
    B, H, W, _ = x.shape
    c = p["c"]
    m = B * H * W

    y01 = conv1x1_bn_silu(x.reshape(m, -1), p["cv1_w"], p["cv1_b"])  # (m, 2c) bf16
    ys, ws = [y01], [p["cv2_w_parts"][0]]
    cur = y01[:, c:]                                          # second chunk, (m, c)
    for bi, blk in enumerate(p["m"]):
        h = conv3x3_bn_silu(cur.reshape(B, H, W, c), blk["cv1_w"], blk["cv1_b"])
        h = conv3x3_bn_silu(h.reshape(B, H, W, c), blk["cv2_w"], blk["cv2_b"])
        h = convmod(h, B, H, W, blk)                          # (m, c) bf16, no shortcut
        ys.append(h)
        ws.append(p["cv2_w_parts"][1 + bi])
        cur = h
    out = concat_conv_silu(ys, ws, p["cv2_b"], x_nchw.dtype)  # (m, c2) f32
    out = out.reshape(B, H, W, -1)
    return jnp.transpose(out, (0, 3, 1, 2))                   # NHWC -> NCHW


# ----------------------------------------------------------------------------
# deterministic synthetic parameters (eval-mode BN folded; weights pre-cast bf16)
# ----------------------------------------------------------------------------
def init_params(key, c1, c2, n):
    c = int(c2 * 0.5)
    keys = iter(jax.random.split(key, 512))

    def nrm(shape, s=0.1):
        return s * jax.random.normal(next(keys), shape, F32)

    def bn_fold(cout):
        gamma = 1.0 + nrm((cout,))
        beta = nrm((cout,))
        mean = nrm((cout,))
        var = jnp.abs(nrm((cout,))) + 1.0
        scale = gamma / jnp.sqrt(var + 1e-5)
        return scale, beta - mean * scale

    p = {"c": c}
    s, t = bn_fold(2 * c)
    p["cv1_w"] = (nrm((c1, 2 * c)) * s[None, :]).astype(BF16)
    p["cv1_b"] = t
    s, t = bn_fold(c2)
    cv2_w = nrm(((2 + n) * c, c2)) * s[None, :]
    # split along K to match the never-materialized concat: [y01 | h_1 .. h_n]
    parts = [cv2_w[:2 * c]] + [cv2_w[2 * c + i * c: 2 * c + (i + 1) * c]
                               for i in range(n)]
    p["cv2_w_parts"] = [w.astype(BF16) for w in parts]
    p["cv2_b"] = t

    blocks = []
    for _ in range(n):
        b = {}
        s, t = bn_fold(c)
        b["cv1_w"] = (nrm((3, 3, c, c)) * s).astype(BF16)     # BN scale over Cout
        b["cv1_b"] = t
        s, t = bn_fold(c)
        b["cv2_w"] = (nrm((3, 3, c, c)) * s).astype(BF16)
        b["cv2_b"] = t
        # ConvMod(c): the a/v 1x1 weights are fused into one (c, 2c) matrix.
        b["ln_g"] = 1.0 + nrm((c,))
        b["ln_b"] = nrm((c,))
        a0_w, v_w = nrm((c, c)), nrm((c, c))
        a0_b, v_b = nrm((c,)), nrm((c,))
        b["av_w"] = jnp.concatenate([a0_w, v_w], axis=1).astype(BF16)
        b["av_b"] = jnp.concatenate([a0_b, v_b])
        b["a2_w"] = nrm((11, 11, c))                          # depthwise (kh, kw, C), f32
        b["a2_b"] = nrm((c,))
        b["proj_w"] = nrm((c, c)).astype(BF16)
        b["proj_b"] = nrm((c,))
        blocks.append(b)
    p["m"] = blocks
    return p


if __name__ == "__main__":
    B, C1, H, W = 2, 8, 16, 16
    C2, N_BLOCKS = 8, 1

    x = jax.random.normal(jax.random.PRNGKey(0), (B, C1, H, W), jnp.float32)
    params = init_params(jax.random.PRNGKey(1), C1, C2, N_BLOCKS)

    out = c2f_convmod_forward(x, params)
    out = jax.block_until_ready(out)

    assert out.shape == (B, C2, H, W)
    assert bool(jnp.all(jnp.isfinite(out)))
    print("KERNEL_OK")
</pallas_src>

<mosaic_0001>
module attributes {stable_mosaic.version = 11 : i64} {
  func.func @kernel(%arg0: i32, %arg1: memref<512x8xf32, #tpu.memory_space<vmem>>, %arg2: memref<8x8xbf16, #tpu.memory_space<vmem>>, %arg3: memref<1x8xf32, #tpu.memory_space<vmem>>, %arg4: memref<512x8xbf16, #tpu.memory_space<vmem>>) attributes {dimension_semantics = [#tpu.dimension_semantics<parallel>], iteration_bounds = array<i64: 1>, scalar_prefetch = 0 : i64, scratch_operands = 0 : i64, tpu.core_type = #tpu.core_type<tc>, window_params = [{transform_indices = @transform_0, window_bounds = array<i64: 512, 8>}, {pipeline_mode = #tpu.pipeline_mode<synchronous>, transform_indices = @transform_1, window_bounds = array<i64: 8, 8>}, {pipeline_mode = #tpu.pipeline_mode<synchronous>, transform_indices = @transform_2, window_bounds = array<i64: 1, 8>}, {transform_indices = @transform_3, window_bounds = array<i64: 512, 8>}]} {
    %c0 = arith.constant 0 : index
    %c0_0 = arith.constant 0 : index
    %0 = vector.load %arg1[%c0, %c0_0] : memref<512x8xf32, #tpu.memory_space<vmem>>, vector<512x8xf32>
    %1 = arith.truncf %0 : vector<512x8xf32> to vector<512x8xbf16>
    %c0_1 = arith.constant 0 : index
    %c0_2 = arith.constant 0 : index
    %2 = vector.load %arg2[%c0_1, %c0_2] : memref<8x8xbf16, #tpu.memory_space<vmem>>, vector<8x8xbf16>
    %cst = arith.constant dense<0.000000e+00> : vector<512x8xf32>
    %3 = tpu.matmul %1, %2, %cst {dimension_numbers = #tpu.dot_dimension_numbers<[1], [0], [0], [1], [0, 0, 1, 1], [], []>} : vector<512x8xbf16>, vector<8x8xbf16>, vector<512x8xf32> -> vector<512x8xf32>
    %c0_3 = arith.constant 0 : index
    %c0_4 = arith.constant 0 : index
    %4 = vector.load %arg3[%c0_3, %c0_4] : memref<1x8xf32, #tpu.memory_space<vmem>>, vector<1x8xf32>
    %5 = vector.broadcast %4 : vector<1x8xf32> to vector<512x8xf32>
    %6 = arith.addf %3, %5 : vector<512x8xf32>
    %7 = arith.negf %6 : vector<512x8xf32>
    %8 = math.exp %7 : vector<512x8xf32>
    %cst_5 = arith.constant 1.000000e+00 : f32
    %9 = vector.broadcast %cst_5 : f32 to vector<512x8xf32>
    %10 = arith.addf %9, %8 : vector<512x8xf32>
    %11 = arith.divf %9, %10 : vector<512x8xf32>
    %12 = arith.mulf %6, %11 : vector<512x8xf32>
    %13 = arith.truncf %12 : vector<512x8xf32> to vector<512x8xbf16>
    %c0_6 = arith.constant 0 : index
    %c0_7 = arith.constant 0 : index
    %14 = vector.load %arg4[%c0_6, %c0_7] : memref<512x8xbf16, #tpu.memory_space<vmem>>, vector<512x8xbf16>
    tpu.vector_store %arg4[%c0_6, %c0_7], %13 {strides = array<i32>} : memref<512x8xbf16, #tpu.memory_space<vmem>>, vector<512x8xbf16>,
    return
  }
  func.func @transform_0(%arg0: i32) -> (i32, i32) {
    %c0_i32 = arith.constant 0 : i32
    %c0_i32_0 = arith.constant 0 : i32
    return %arg0, %c0_i32 : i32, i32
  }
  func.func @transform_1(%arg0: i32) -> (i32, i32) {
    %c0_i32 = arith.constant 0 : i32
    %c0_i32_0 = arith.constant 0 : i32
    %c0_i32_1 = arith.constant 0 : i32
    return %c0_i32, %c0_i32_0 : i32, i32
  }
  func.func @transform_2(%arg0: i32) -> (i32, i32) {
    %c0_i32 = arith.constant 0 : i32
    %c0_i32_0 = arith.constant 0 : i32
    %c0_i32_1 = arith.constant 0 : i32
    return %c0_i32, %c0_i32_0 : i32, i32
  }
  func.func @transform_3(%arg0: i32) -> (i32, i32) {
    %c0_i32 = arith.constant 0 : i32
    %c0_i32_0 = arith.constant 0 : i32
    return %arg0, %c0_i32 : i32, i32
  }
}

</mosaic_0001>

<llo_original>
// kernel: tpu_custom_call.1
$region0: #{tpu_custom_call.1}
  #allocation0 [shape = 'u32[]', space=smem, size = 0x4, offset = 0x4, fixed_abs, tag = 'smem constant byte address 0x4 - core index']
  #allocation1 [shape = 'u32[144,128]{1,0:T(1,128)}', space=vmem, size = 0x12000, scoped, tag = 'internal scratch']
  %s0 = inlined_call_operand.vmem [shape: f32[512,8], index: 0, kind: input, shape index: {}]
  %s1 = inlined_call_operand.vmem [shape: bf16[8,8], index: 1, kind: input, shape index: {}]
  %s2 = inlined_call_operand.vmem [shape: f32[1,8], index: 2, kind: input, shape index: {}]
  %s3 = inlined_call_operand.vmem [shape: bf16[512,8], index: 3, kind: output, shape index: {}]
  %s4 = sld [smem:[#allocation0]]
  $region22: #{tpu_custom_call.1} parent=0
    _
  %s6 = ssub.s32 1, %s4
  %s7 = scalar_select 0, %s6, %s4
  // Predicated region
  $region2: #{tpu_custom_call.1} parent=0 // pred_check
    _
  $region3: #{tpu_custom_call.1} parent=0 // pred_check_branch
    %9 = sbr.rel (0) target = $region5
  $region4: #{tpu_custom_call.1} parent=0 // pred_region
    _
  $region5: #{tpu_custom_call.1} parent=0 // pred_fallthru
    _
  // Predicated region
  $region6: #{tpu_custom_call.1} parent=0 // pred_check
    _
  $region7: #{tpu_custom_call.1} parent=0 // pred_check_branch
    %11 = sbr.rel (0) target = $region9
  $region8: #{tpu_custom_call.1} parent=0 // pred_region
    _
  $region9: #{tpu_custom_call.1} parent=0 // pred_fallthru
    _
  // Predicated region
  $region10: #{tpu_custom_call.1} parent=0 // pred_check
    _
  $region11: #{tpu_custom_call.1} parent=0 // pred_check_branch
    %13 = sbr.rel (0) target = $region13
  $region12: #{tpu_custom_call.1} parent=0 // pred_region
    _
  $region13: #{tpu_custom_call.1} parent=0 // pred_fallthru
    _
  %v15 = vld [vmem:[%s0] sm:$0xff]
  %v16 = vld [vmem:[%s0 + $0x8] sm:$0xff]
  %v17 = vld [vmem:[%s0 + $0x10] sm:$0xff]
  %v18 = vld [vmem:[%s0 + $0x18] sm:$0xff]
  %v19 = vld [vmem:[%s0 + $0x20] sm:$0xff]
  %v20 = vld [vmem:[%s0 + $0x28] sm:$0xff]
  %v21 = vld [vmem:[%s0 + $0x30] sm:$0xff]
  %v22 = vld [vmem:[%s0 + $0x38] sm:$0xff]
  %v23 = vld [vmem:[%s0 + $0x40] sm:$0xff]
  %v24 = vld [vmem:[%s0 + $0x48] sm:$0xff]
  %v25 = vld [vmem:[%s0 + $0x50] sm:$0xff]
  %v26 = vld [vmem:[%s0 + $0x58] sm:$0xff]
  %v27 = vld [vmem:[%s0 + $0x60] sm:$0xff]
  %v28 = vld [vmem:[%s0 + $0x68] sm:$0xff]
  %v29 = vld [vmem:[%s0 + $0x70] sm:$0xff]
  %v30 = vld [vmem:[%s0 + $0x78] sm:$0xff]
  %v31 = vld [vmem:[%s0 + $0x80] sm:$0xff]
  %v32 = vld [vmem:[%s0 + $0x88] sm:$0xff]
  %v33 = vld [vmem:[%s0 + $0x90] sm:$0xff]
  %v34 = vld [vmem:[%s0 + $0x98] sm:$0xff]
  %v35 = vld [vmem:[%s0 + $0xa0] sm:$0xff]
  %v36 = vld [vmem:[%s0 + $0xa8] sm:$0xff]
  %v37 = vld [vmem:[%s0 + $0xb0] sm:$0xff]
  %v38 = vld [vmem:[%s0 + $0xb8] sm:$0xff]
  %v39 = vld [vmem:[%s0 + $0xc0] sm:$0xff]
  %v40 = vld [vmem:[%s0 + $0xc8] sm:$0xff]
  %v41 = vld [vmem:[%s0 + $0xd0] sm:$0xff]
  %v42 = vld [vmem:[%s0 + $0xd8] sm:$0xff]
  %v43 = vld [vmem:[%s0 + $0xe0] sm:$0xff]
  %v44 = vld [vmem:[%s0 + $0xe8] sm:$0xff]
  %v45 = vld [vmem:[%s0 + $0xf0] sm:$0xff]
  %v46 = vld [vmem:[%s0 + $0xf8] sm:$0xff]
  %v47 = vld [vmem:[%s0 + $0x100] sm:$0xff]
  %v48 = vld [vmem:[%s0 + $0x108] sm:$0xff]
  %v49 = vld [vmem:[%s0 + $0x110] sm:$0xff]
  %v50 = vld [vmem:[%s0 + $0x118] sm:$0xff]
  %v51 = vld [vmem:[%s0 + $0x120] sm:$0xff]
  %v52 = vld [vmem:[%s0 + $0x128] sm:$0xff]
  %v53 = vld [vmem:[%s0 + $0x130] sm:$0xff]
  %v54 = vld [vmem:[%s0 + $0x138] sm:$0xff]
  %v55 = vld [vmem:[%s0 + $0x140] sm:$0xff]
  %v56 = vld [vmem:[%s0 + $0x148] sm:$0xff]
  %v57 = vld [vmem:[%s0 + $0x150] sm:$0xff]
  %v58 = vld [vmem:[%s0 + $0x158] sm:$0xff]
  %v59 = vld [vmem:[%s0 + $0x160] sm:$0xff]
  %v60 = vld [vmem:[%s0 + $0x168] sm:$0xff]
  %v61 = vld [vmem:[%s0 + $0x170] sm:$0xff]
  %v62 = vld [vmem:[%s0 + $0x178] sm:$0xff]
  %v63 = vld [vmem:[%s0 + $0x180] sm:$0xff]
  %v64 = vld [vmem:[%s0 + $0x188] sm:$0xff]
  %v65 = vld [vmem:[%s0 + $0x190] sm:$0xff]
  %v66 = vld [vmem:[%s0 + $0x198] sm:$0xff]
  %v67 = vld [vmem:[%s0 + $0x1a0] sm:$0xff]
  %v68 = vld [vmem:[%s0 + $0x1a8] sm:$0xff]
  %v69 = vld [vmem:[%s0 + $0x1b0] sm:$0xff]
  %v70 = vld [vmem:[%s0 + $0x1b8] sm:$0xff]
  %v71 = vld [vmem:[%s0 + $0x1c0] sm:$0xff]
  %v72 = vld [vmem:[%s0 + $0x1c8] sm:$0xff]
  %v73 = vld [vmem:[%s0 + $0x1d0] sm:$0xff]
  %v74 = vld [vmem:[%s0 + $0x1d8] sm:$0xff]
  %v75 = vld [vmem:[%s0 + $0x1e0] sm:$0xff]
  %v76 = vld [vmem:[%s0 + $0x1e8] sm:$0xff]
  %v77 = vld [vmem:[%s0 + $0x1f0] sm:$0xff]
  %v78 = vld [vmem:[%s0 + $0x1f8] sm:$0xff]
  %v79 = vpack.c.bf16 %v16, %v15
  %v80 = vpack.c.bf16 %v18, %v17
  %v81 = vpack.c.bf16 %v20, %v19
  %v82 = vpack.c.bf16 %v22, %v21
  %v83 = vpack.c.bf16 %v24, %v23
  %v84 = vpack.c.bf16 %v26, %v25
  %v85 = vpack.c.bf16 %v28, %v27
  %v86 = vpack.c.bf16 %v30, %v29
  %v87 = vpack.c.bf16 %v32, %v31
  %v88 = vpack.c.bf16 %v34, %v33
  %v89 = vpack.c.bf16 %v36, %v35
  %v90 = vpack.c.bf16 %v38, %v37
  %v91 = vpack.c.bf16 %v40, %v39
  %v92 = vpack.c.bf16 %v42, %v41
  %v93 = vpack.c.bf16 %v44, %v43
  %v94 = vpack.c.bf16 %v46, %v45
  %v95 = vpack.c.bf16 %v48, %v47
  %v96 = vpack.c.bf16 %v50, %v49
  %v97 = vpack.c.bf16 %v52, %v51
  %v98 = vpack.c.bf16 %v54, %v53
  %v99 = vpack.c.bf16 %v56, %v55
  %v100 = vpack.c.bf16 %v58, %v57
  %v101 = vpack.c.bf16 %v60, %v59
  %v102 = vpack.c.bf16 %v62, %v61
  %v103 = vpack.c.bf16 %v64, %v63
  %v104 = vpack.c.bf16 %v66, %v65
  %v105 = vpack.c.bf16 %v68, %v67
  %v106 = vpack.c.bf16 %v70, %v69
  %v107 = vpack.c.bf16 %v72, %v71
  %v108 = vpack.c.bf16 %v74, %v73
  %v109 = vpack.c.bf16 %v76, %v75
  %v110 = vpack.c.bf16 %v78, %v77
  %v111 = vld [vmem:[%s1] sm:$0xf]
  %v112 = vld [vmem:[%s2] sm:$0x1]
  %v114 = vlaneseq
  %v115 = vshrl.u32 %v114, 7
  %v116 = vsub.s32 0, %v115
  %v117 = vrot.slane %v112, %v116
  %vm119 = vcmask 64512
  %v121 = vsel %vm119, %v79, 0
  %v124 = vsel %vm119, %v80, 0
  %v127 = vsel %vm119, %v81, 0
  %v130 = vsel %vm119, %v82, 0
  %v133 = vsel %vm119, %v83, 0
  %v136 = vsel %vm119, %v84, 0
  %v139 = vsel %vm119, %v85, 0
  %v142 = vsel %vm119, %v86, 0
  %v145 = vsel %vm119, %v87, 0
  %v148 = vsel %vm119, %v88, 0
  %v151 = vsel %vm119, %v89, 0
  %v154 = vsel %vm119, %v90, 0
  %v157 = vsel %vm119, %v91, 0
  %v160 = vsel %vm119, %v92, 0
  %v163 = vsel %vm119, %v93, 0
  %v166 = vsel %vm119, %v94, 0
  %v169 = vsel %vm119, %v95, 0
  %v172 = vsel %vm119, %v96, 0
  %v175 = vsel %vm119, %v97, 0
  %v178 = vsel %vm119, %v98, 0
  %v181 = vsel %vm119, %v99, 0
  %v184 = vsel %vm119, %v100, 0
  %v187 = vsel %vm119, %v101, 0
  %v190 = vsel %vm119, %v102, 0
  %v193 = vsel %vm119, %v103, 0
  %v196 = vsel %vm119, %v104, 0
  %v199 = vsel %vm119, %v105, 0
  %v202 = vsel %vm119, %v106, 0
  %v205 = vsel %vm119, %v107, 0
  %v208 = vsel %vm119, %v108, 0
  %v211 = vsel %vm119, %v109, 0
  %v214 = vsel %vm119, %v110, 0
  %vm216 = vcmask 1043456
  %v218 = vsel %vm216, %v111, 0
  %220 = vmatprep.subr.bf16.mxu0 0
  %221 = vmatpush1.bf16.msra.mxu0 %v218
  %222 = vmatprep.subr.bf16.mxu0 0
  %223 = vmatpush1.bf16.msra.mxu0 0
  %224 = vmatprep.subr.bf16.mxu0 0
  %225 = vmatpush1.bf16.msra.mxu0 0
  %226 = vmatprep.subr.bf16.mxu0 0
  %227 = vmatpush1.bf16.msra.mxu0 0
  %228 = vmatprep.subr.bf16.mxu0 0
  %229 = vmatpush1.bf16.msra.mxu0 0
  %230 = vmatprep.subr.bf16.mxu0 0
  %231 = vmatpush1.bf16.msra.mxu0 0
  %232 = vmatprep.subr.bf16.mxu0 0
  %233 = vmatpush1.bf16.msra.mxu0 0
  %234 = vmatprep.subr.bf16.mxu0 0
  %235 = vmatpush1.bf16.msra.mxu0 0
  %236 = vmatprep.subr.bf16.mxu0 0
  %237 = vmatpush1.bf16.msra.mxu0 0
  %238 = vmatprep.subr.bf16.mxu0 0
  %239 = vmatpush1.bf16.msra.mxu0 0
  %240 = vmatprep.subr.bf16.mxu0 0
  %241 = vmatpush1.bf16.msra.mxu0 0
  %242 = vmatprep.subr.bf16.mxu0 0
  %243 = vmatpush1.bf16.msra.mxu0 0
  %244 = vmatprep.subr.bf16.mxu0 0
  %245 = vmatpush1.bf16.msra.mxu0 0
  %246 = vmatprep.subr.bf16.mxu0 0
  %247 = vmatpush1.bf16.msra.mxu0 0
  %248 = vmatprep.subr.bf16.mxu0 0
  %249 = vmatpush1.bf16.msra.mxu0 0
  %250 = vmatprep.subr.bf16.mxu0 0
  %251 = vmatpush1.bf16.msra.mxu0 0
  %252 = vmatprep.mubr.bf16.mxu0 0
  %253 = vmatmul.mubr.bf16.gmra.mrb[0].mxu0 %v121
  %v254 = vpop.f32.mrb[0].mxu0
  %v255 = vadd.f32 %v117, %v254
  %v256 = vpop.f32.mrb[0].mxu0
  %v257 = vpop.f32.mrb[0].mxu0
  %v258 = vadd.f32 %v117, %v257
  %v259 = vpop.f32.mrb[0].mxu0
  %260 = vmatprep.mubr.bf16.mxu0 0
  %261 = vmatmul.mubr.bf16.gmra.mrb[0].mxu0 %v124
  %v262 = vpop.f32.mrb[0].mxu0
  %v263 = vadd.f32 %v117, %v262
  %v264 = vpop.f32.mrb[0].mxu0
  %v265 = vpop.f32.mrb[0].mxu0
  %v266 = vadd.f32 %v117, %v265
  %v267 = vpop.f32.mrb[0].mxu0
  %268 = vmatprep.mubr.bf16.mxu0 0
  %269 = vmatmul.mubr.bf16.gmra.mrb[0].mxu0 %v127
  %v270 = vpop.f32.mrb[0].mxu0
  %v271 = vadd.f32 %v117, %v270
  %v272 = vpop.f32.mrb[0].mxu0
  %v273 = vpop.f32.mrb[0].mxu0
  %v274 = vadd.f32 %v117, %v273
  %v275 = vpop.f32.mrb[0].mxu0
  %276 = vmatprep.mubr.bf16.mxu0 0
  %277 = vmatmul.mubr.bf16.gmra.mrb[0].mxu0 %v130
  %v278 = vpop.f32.mrb[0].mxu0
  %v279 = vadd.f32 %v117, %v278
  %v280 = vpop.f32.mrb[0].mxu0
  %v281 = vpop.f32.mrb[0].mxu0
  %v282 = vadd.f32 %v117, %v281
  %v283 = vpop.f32.mrb[0].mxu0
  %284 = vmatprep.mubr.bf16.mxu0 0
  %285 = vmatmul.mubr.bf16.gmra.mrb[0].mxu0 %v133
  %v286 = vpop.f32.mrb[0].mxu0
  %v287 = vadd.f32 %v117, %v286
  %v288 = vpop.f32.mrb[0].mxu0
  %v289 = vpop.f32.mrb[0].mxu0
  %v290 = vadd.f32 %v117, %v289
  %v291 = vpop.f32.mrb[0].mxu0
  %292 = vmatprep.mubr.bf16.mxu0 0
  %293 = vmatmul.mubr.bf16.gmra.mrb[0].mxu0 %v136
  %v294 = vpop.f32.mrb[0].mxu0
  %v295 = vadd.f32 %v117, %v294
  %v296 = vpop.f32.mrb[0].mxu0
  %v297 = vpop.f32.mrb[0].mxu0
  %v298 = vadd.f32 %v117, %v297
  %v299 = vpop.f32.mrb[0].mxu0
  %300 = vmatprep.mubr.bf16.mxu0 0
  %301 = vmatmul.mubr.bf16.gmra.mrb[0].mxu0 %v139
  %v302 = vpop.f32.mrb[0].mxu0
  %v303 = vadd.f32 %v117, %v302
  %v304 = vpop.f32.mrb[0].mxu0
  %v305 = vpop.f32.mrb[0].mxu0
  %v306 = vadd.f32 %v117, %v305
  %v307 = vpop.f32.mrb[0].mxu0
  %308 = vmatprep.mubr.bf16.mxu0 0
  %309 = vmatmul.mubr.bf16.gmra.mrb[0].mxu0 %v142
  %v310 = vpop.f32.mrb[0].mxu0
  %v311 = vadd.f32 %v117, %v310
  %v312 = vpop.f32.mrb[0].mxu0
  %v313 = vpop.f32.mrb[0].mxu0
  %v314 = vadd.f32 %v117, %v313
  %v315 = vpop.f32.mrb[0].mxu0
  %316 = vmatprep.mubr.bf16.mxu0 0
  %317 = vmatmul.mubr.bf16.gmra.mrb[0].mxu0 %v145
  %v318 = vpop.f32.mrb[0].mxu0
  %v319 = vadd.f32 %v117, %v318
  %v320 = vpop.f32.mrb[0].mxu0
  %v321 = vpop.f32.mrb[0].mxu0
  %v322 = vadd.f32 %v117, %v321
  %v323 = vpop.f32.mrb[0].mxu0
  %324 = vmatprep.mubr.bf16.mxu0 0
  %325 = vmatmul.mubr.bf16.gmra.mrb[0].mxu0 %v148
  %v326 = vpop.f32.mrb[0].mxu0
  %v327 = vadd.f32 %v117, %v326
  %v328 = vpop.f32.mrb[0].mxu0
  %v329 = vpop.f32.mrb[0].mxu0
  %v330 = vadd.f32 %v117, %v329
  %v331 = vpop.f32.mrb[0].mxu0
  %332 = vmatprep.mubr.bf16.mxu0 0
  %333 = vmatmul.mubr.bf16.gmra.mrb[0].mxu0 %v151
  %v334 = vpop.f32.mrb[0].mxu0
  %v335 = vadd.f32 %v117, %v334
  %v336 = vpop.f32.mrb[0].mxu0
  %v337 = vpop.f32.mrb[0].mxu0
  %v338 = vadd.f32 %v117, %v337
  %v339 = vpop.f32.mrb[0].mxu0
  %340 = vmatprep.mubr.bf16.mxu0 0
  %341 = vmatmul.mubr.bf16.gmra.mrb[0].mxu0 %v154
  %v342 = vpop.f32.mrb[0].mxu0
  %v343 = vadd.f32 %v117, %v342
  %v344 = vpop.f32.mrb[0].mxu0
  %v345 = vpop.f32.mrb[0].mxu0
  %v346 = vadd.f32 %v117, %v345
  %v347 = vpop.f32.mrb[0].mxu0
  %348 = vmatprep.mubr.bf16.mxu0 0
  %349 = vmatmul.mubr.bf16.gmra.mrb[0].mxu0 %v157
  %v350 = vpop.f32.mrb[0].mxu0
  %v351 = vadd.f32 %v117, %v350
  %v352 = vpop.f32.mrb[0].mxu0
  %v353 = vpop.f32.mrb[0].mxu0
  %v354 = vadd.f32 %v117, %v353
  %v355 = vpop.f32.mrb[0].mxu0
  %356 = vmatprep.mubr.bf16.mxu0 0
  %357 = vmatmul.mubr.bf16.gmra.mrb[0].mxu0 %v160
  %v358 = vpop.f32.mrb[0].mxu0
  %v359 = vadd.f32 %v117, %v358
  %v360 = vpop.f32.mrb[0].mxu0
  %v361 = vpop.f32.mrb[0].mxu0
  %v362 = vadd.f32 %v117, %v361
  %v363 = vpop.f32.mrb[0].mxu0
  %364 = vmatprep.mubr.bf16.mxu0 0
  %365 = vmatmul.mubr.bf16.gmra.mrb[0].mxu0 %v163
  %v366 = vpop.f32.mrb[0].mxu0
  %v367 = vadd.f32 %v117, %v366
  %v368 = vpop.f32.mrb[0].mxu0
  %v369 = vpop.f32.mrb[0].mxu0
  %v370 = vadd.f32 %v117, %v369
  %v371 = vpop.f32.mrb[0].mxu0
  %372 = vmatprep.mubr.bf16.mxu0 0
  %373 = vmatmul.mubr.bf16.gmra.mrb[0].mxu0 %v166
  %v374 = vpop.f32.mrb[0].mxu0
  %v375 = vadd.f32 %v117, %v374
  %v376 = vpop.f32.mrb[0].mxu0
  %v377 = vpop.f32.mrb[0].mxu0
  %v378 = vadd.f32 %v117, %v377
  %v379 = vpop.f32.mrb[0].mxu0
  %380 = vmatprep.mubr.bf16.mxu0 0
  %381 = vmatmul.mubr.bf16.gmra.mrb[0].mxu0 %v169
  %v382 = vpop.f32.mrb[0].mxu0
  %v383 = vadd.f32 %v117, %v382
  %v384 = vpop.f32.mrb[0].mxu0
  %v385 = vpop.f32.mrb[0].mxu0
  %v386 = vadd.f32 %v117, %v385
  %v387 = vpop.f32.mrb[0].mxu0
  %388 = vmatprep.mubr.bf16.mxu0 0
  %389 = vmatmul.mubr.bf16.gmra.mrb[0].mxu0 %v172
  %v390 = vpop.f32.mrb[0].mxu0
  %v391 = vadd.f32 %v117, %v390
  %v392 = vpop.f32.mrb[0].mxu0
  %v393 = vpop.f32.mrb[0].mxu0
  %v394 = vadd.f32 %v117, %v393
  %v395 = vpop.f32.mrb[0].mxu0
  %396 = vmatprep.mubr.bf16.mxu0 0
  %397 = vmatmul.mubr.bf16.gmra.mrb[0].mxu0 %v175
  %v398 = vpop.f32.mrb[0].mxu0
  %v399 = vadd.f32 %v117, %v398
  %v400 = vpop.f32.mrb[0].mxu0
  %v401 = vpop.f32.mrb[0].mxu0
  %v402 = vadd.f32 %v117, %v401
  %v403 = vpop.f32.mrb[0].mxu0
  %404 = vmatprep.mubr.bf16.mxu0 0
  %405 = vmatmul.mubr.bf16.gmra.mrb[0].mxu0 %v178
  %v406 = vpop.f32.mrb[0].mxu0
  %v407 = vadd.f32 %v117, %v406
  %v408 = vpop.f32.mrb[0].mxu0
  %v409 = vpop.f32.mrb[0].mxu0
  %v410 = vadd.f32 %v117, %v409
  %v411 = vpop.f32.mrb[0].mxu0
  %412 = vmatprep.mubr.bf16.mxu0 0
  %413 = vmatmul.mubr.bf16.gmra.mrb[0].mxu0 %v181
  %v414 = vpop.f32.mrb[0].mxu0
  %v415 = vadd.f32 %v117, %v414
  %v416 = vpop.f32.mrb[0].mxu0
  %v417 = vpop.f32.mrb[0].mxu0
  %v418 = vadd.f32 %v117, %v417
  %v419 = vpop.f32.mrb[0].mxu0
  %420 = vmatprep.mubr.bf16.mxu0 0
  %421 = vmatmul.mubr.bf16.gmra.mrb[0].mxu0 %v184
  %v422 = vpop.f32.mrb[0].mxu0
  %v423 = vadd.f32 %v117, %v422
  %v424 = vpop.f32.mrb[0].mxu0
  %v425 = vpop.f32.mrb[0].mxu0
  %v426 = vadd.f32 %v117, %v425
  %v427 = vpop.f32.mrb[0].mxu0
  %428 = vmatprep.mubr.bf16.mxu0 0
  %429 = vmatmul.mubr.bf16.gmra.mrb[0].mxu0 %v187
  %v430 = vpop.f32.mrb[0].mxu0
  %v431 = vadd.f32 %v117, %v430
  %v432 = vpop.f32.mrb[0].mxu0
  %v433 = vpop.f32.mrb[0].mxu0
  %v434 = vadd.f32 %v117, %v433
  %v435 = vpop.f32.mrb[0].mxu0
  %436 = vmatprep.mubr.bf16.mxu0 0
  %437 = vmatmul.mubr.bf16.gmra.mrb[0].mxu0 %v190
  %v438 = vpop.f32.mrb[0].mxu0
  %v439 = vadd.f32 %v117, %v438
  %v440 = vpop.f32.mrb[0].mxu0
  %v441 = vpop.f32.mrb[0].mxu0
  %v442 = vadd.f32 %v117, %v441
  %v443 = vpop.f32.mrb[0].mxu0
  %444 = vmatprep.mubr.bf16.mxu0 0
  %445 = vmatmul.mubr.bf16.gmra.mrb[0].mxu0 %v193
  %v446 = vpop.f32.mrb[0].mxu0
  %v447 = vadd.f32 %v117, %v446
  %v448 = vpop.f32.mrb[0].mxu0
  %v449 = vpop.f32.mrb[0].mxu0
  %v450 = vadd.f32 %v117, %v449
  %v451 = vpop.f32.mrb[0].mxu0
  %452 = vmatprep.mubr.bf16.mxu0 0
  %453 = vmatmul.mubr.bf16.gmra.mrb[0].mxu0 %v196
  %v454 = vpop.f32.mrb[0].mxu0
  %v455 = vadd.f32 %v117, %v454
  %v456 = vpop.f32.mrb[0].mxu0
  %v457 = vpop.f32.mrb[0].mxu0
  %v458 = vadd.f32 %v117, %v457
  %v459 = vpop.f32.mrb[0].mxu0
  %460 = vmatprep.mubr.bf16.mxu0 0
  %461 = vmatmul.mubr.bf16.gmra.mrb[0].mxu0 %v199
  %v462 = vpop.f32.mrb[0].mxu0
  %v463 = vadd.f32 %v117, %v462
  %v464 = vpop.f32.mrb[0].mxu0
  %v465 = vpop.f32.mrb[0].mxu0
  %v466 = vadd.f32 %v117, %v465
  %v467 = vpop.f32.mrb[0].mxu0
  %468 = vmatprep.mubr.bf16.mxu0 0
  %469 = vmatmul.mubr.bf16.gmra.mrb[0].mxu0 %v202
  %v470 = vpop.f32.mrb[0].mxu0
  %v471 = vadd.f32 %v117, %v470
  %v472 = vpop.f32.mrb[0].mxu0
  %v473 = vpop.f32.mrb[0].mxu0
  %v474 = vadd.f32 %v117, %v473
  %v475 = vpop.f32.mrb[0].mxu0
  %476 = vmatprep.mubr.bf16.mxu0 0
  %477 = vmatmul.mubr.bf16.gmra.mrb[0].mxu0 %v205
  %v478 = vpop.f32.mrb[0].mxu0
  %v479 = vadd.f32 %v117, %v478
  %v480 = vpop.f32.mrb[0].mxu0
  %v481 = vpop.f32.mrb[0].mxu0
  %v482 = vadd.f32 %v117, %v481
  %v483 = vpop.f32.mrb[0].mxu0
  %484 = vmatprep.mubr.bf16.mxu0 0
  %485 = vmatmul.mubr.bf16.gmra.mrb[0].mxu0 %v208
  %v486 = vpop.f32.mrb[0].mxu0
  %v487 = vadd.f32 %v117, %v486
  %v488 = vpop.f32.mrb[0].mxu0
  %v489 = vpop.f32.mrb[0].mxu0
  %v490 = vadd.f32 %v117, %v489
  %v491 = vpop.f32.mrb[0].mxu0
  %492 = vmatprep.mubr.bf16.mxu0 0
  %493 = vmatmul.mubr.bf16.gmra.mrb[0].mxu0 %v211
  %v494 = vpop.f32.mrb[0].mxu0
  %v495 = vadd.f32 %v117, %v494
  %v496 = vpop.f32.mrb[0].mxu0
  %v497 = vpop.f32.mrb[0].mxu0
  %v498 = vadd.f32 %v117, %v497
  %v499 = vpop.f32.mrb[0].mxu0
  %500 = vmatprep.mubr.bf16.mxu0 0
  %501 = vmatmul.mubr.bf16.gmra.mrb[0].mxu0 %v214
  %v502 = vpop.f32.mrb[0].mxu0
  %v503 = vadd.f32 %v117, %v502
  %v504 = vpop.f32.mrb[0].mxu0
  %v505 = vpop.f32.mrb[0].mxu0
  %v506 = vadd.f32 %v117, %v505
  %v507 = vpop.f32.mrb[0].mxu0
  %508 = vdwg.mxu0
  %v509 = vxor.u32 %v255, 2147483648
  %v510 = vxor.u32 %v258, 2147483648
  %v511 = vxor.u32 %v263, 2147483648
  %v512 = vxor.u32 %v266, 2147483648
  %v513 = vxor.u32 %v271, 2147483648
  %v514 = vxor.u32 %v274, 2147483648
  %v515 = vxor.u32 %v279, 2147483648
  %v516 = vxor.u32 %v282, 2147483648
  %v517 = vxor.u32 %v287, 2147483648
  %v518 = vxor.u32 %v290, 2147483648
  %v519 = vxor.u32 %v295, 2147483648
  %v520 = vxor.u32 %v298, 2147483648
  %v521 = vxor.u32 %v303, 2147483648
  %v522 = vxor.u32 %v306, 2147483648
  %v523 = vxor.u32 %v311, 2147483648
  %v524 = vxor.u32 %v314, 2147483648
  %v525 = vxor.u32 %v319, 2147483648
  %v526 = vxor.u32 %v322, 2147483648
  %v527 = vxor.u32 %v327, 2147483648
  %v528 = vxor.u32 %v330, 2147483648
  %v529 = vxor.u32 %v335, 2147483648
  %v530 = vxor.u32 %v338, 2147483648
  %v531 = vxor.u32 %v343, 2147483648
  %v532 = vxor.u32 %v346, 2147483648
  %v533 = vxor.u32 %v351, 2147483648
  %v534 = vxor.u32 %v354, 2147483648
  %v535 = vxor.u32 %v359, 2147483648
  %v536 = vxor.u32 %v362, 2147483648
  %v537 = vxor.u32 %v367, 2147483648
  %v538 = vxor.u32 %v370, 2147483648
  %v539 = vxor.u32 %v375, 2147483648
  %v540 = vxor.u32 %v378, 2147483648
  %v541 = vxor.u32 %v383, 2147483648
  %v542 = vxor.u32 %v386, 2147483648
  %v543 = vxor.u32 %v391, 2147483648
  %v544 = vxor.u32 %v394, 2147483648
  %v545 = vxor.u32 %v399, 2147483648
  %v546 = vxor.u32 %v402, 2147483648
  %v547 = vxor.u32 %v407, 2147483648
  %v548 = vxor.u32 %v410, 2147483648
  %v549 = vxor.u32 %v415, 2147483648
  %v550 = vxor.u32 %v418, 2147483648
  %v551 = vxor.u32 %v423, 2147483648
  %v552 = vxor.u32 %v426, 2147483648
  %v553 = vxor.u32 %v431, 2147483648
  %v554 = vxor.u32 %v434, 2147483648
  %v555 = vxor.u32 %v439, 2147483648
  %v556 = vxor.u32 %v442, 2147483648
  %v557 = vxor.u32 %v447, 2147483648
  %v558 = vxor.u32 %v450, 2147483648
  %v559 = vxor.u32 %v455, 2147483648
  %v560 = vxor.u32 %v458, 2147483648
  %v561 = vxor.u32 %v463, 2147483648
  %v562 = vxor.u32 %v466, 2147483648
  %v563 = vxor.u32 %v471, 2147483648
  %v564 = vxor.u32 %v474, 2147483648
  %v565 = vxor.u32 %v479, 2147483648
  %v566 = vxor.u32 %v482, 2147483648
  %v567 = vxor.u32 %v487, 2147483648
  %v568 = vxor.u32 %v490, 2147483648
  %v569 = vxor.u32 %v495, 2147483648
  %v570 = vxor.u32 %v498, 2147483648
  %v571 = vxor.u32 %v503, 2147483648
  %v572 = vxor.u32 %v506, 2147483648
  %v573 = vmul.f32 %v509, 1.442695
  %v574 = vpow.pop %v573
  %v575 = vmul.f32 %v510, 1.442695
  %v576 = vpow.pop %v575
  %v577 = vmul.f32 %v511, 1.442695
  %v578 = vpow.pop %v577
  %v579 = vmul.f32 %v512, 1.442695
  %v580 = vpow.pop %v579
  %v581 = vmul.f32 %v513, 1.442695
  %v582 = vpow.pop %v581
  %v583 = vmul.f32 %v514, 1.442695
  %v584 = vpow.pop %v583
  %v585 = vmul.f32 %v515, 1.442695
  %v586 = vpow.pop %v585
  %v587 = vmul.f32 %v516, 1.442695
  %v588 = vpow.pop %v587
  %v589 = vmul.f32 %v517, 1.442695
  %v590 = vpow.pop %v589
  %v591 = vmul.f32 %v518, 1.442695
  %v592 = vpow.pop %v591
  %v593 = vmul.f32 %v519, 1.442695
  %v594 = vpow.pop %v593
  %v595 = vmul.f32 %v520, 1.442695
  %v596 = vpow.pop %v595
  %v597 = vmul.f32 %v521, 1.442695
  %v598 = vpow.pop %v597
  %v599 = vmul.f32 %v522, 1.442695
  %v600 = vpow.pop %v599
  %v601 = vmul.f32 %v523, 1.442695
  %v602 = vpow.pop %v601
  %v603 = vmul.f32 %v524, 1.442695
  %v604 = vpow.pop %v603
  %v605 = vmul.f32 %v525, 1.442695
  %v606 = vpow.pop %v605
  %v607 = vmul.f32 %v526, 1.442695
  %v608 = vpow.pop %v607
  %v609 = vmul.f32 %v527, 1.442695
  %v610 = vpow.pop %v609
  %v611 = vmul.f32 %v528, 1.442695
  %v612 = vpow.pop %v611
  %v613 = vmul.f32 %v529, 1.442695
  %v614 = vpow.pop %v613
  %v615 = vmul.f32 %v530, 1.442695
  %v616 = vpow.pop %v615
  %v617 = vmul.f32 %v531, 1.442695
  %v618 = vpow.pop %v617
  %v619 = vmul.f32 %v532, 1.442695
  %v620 = vpow.pop %v619
  %v621 = vmul.f32 %v533, 1.442695
  %v622 = vpow.pop %v621
  %v623 = vmul.f32 %v534, 1.442695
  %v624 = vpow.pop %v623
  %v625 = vmul.f32 %v535, 1.442695
  %v626 = vpow.pop %v625
  %v627 = vmul.f32 %v536, 1.442695
  %v628 = vpow.pop %v627
  %v629 = vmul.f32 %v537, 1.442695
  %v630 = vpow.pop %v629
  %v631 = vmul.f32 %v538, 1.442695
  %v632 = vpow.pop %v631
  %v633 = vmul.f32 %v539, 1.442695
  %v634 = vpow.pop %v633
  %v635 = vmul.f32 %v540, 1.442695
  %v636 = vpow.pop %v635
  %v637 = vmul.f32 %v541, 1.442695
  %v638 = vpow.pop %v637
  %v639 = vmul.f32 %v542, 1.442695
  %v640 = vpow.pop %v639
  %v641 = vmul.f32 %v543, 1.442695
  %v642 = vpow.pop %v641
  %v643 = vmul.f32 %v544, 1.442695
  %v644 = vpow.pop %v643
  %v645 = vmul.f32 %v545, 1.442695
  %v646 = vpow.pop %v645
  %v647 = vmul.f32 %v546, 1.442695
  %v648 = vpow.pop %v647
  %v649 = vmul.f32 %v547, 1.442695
  %v650 = vpow.pop %v649
  %v651 = vmul.f32 %v548, 1.442695
  %v652 = vpow.pop %v651
  %v653 = vmul.f32 %v549, 1.442695
  %v654 = vpow.pop %v653
  %v655 = vmul.f32 %v550, 1.442695
  %v656 = vpow.pop %v655
  %v657 = vmul.f32 %v551, 1.442695
  %v658 = vpow.pop %v657
  %v659 = vmul.f32 %v552, 1.442695
  %v660 = vpow.pop %v659
  %v661 = vmul.f32 %v553, 1.442695
  %v662 = vpow.pop %v661
  %v663 = vmul.f32 %v554, 1.442695
  %v664 = vpow.pop %v663
  %v665 = vmul.f32 %v555, 1.442695
  %v666 = vpow.pop %v665
  %v667 = vmul.f32 %v556, 1.442695
  %v668 = vpow.pop %v667
  %v669 = vmul.f32 %v557, 1.442695
  %v670 = vpow.pop %v669
  %v671 = vmul.f32 %v558, 1.442695
  %v672 = vpow.pop %v671
  %v673 = vmul.f32 %v559, 1.442695
  %v674 = vpow.pop %v673
  %v675 = vmul.f32 %v560, 1.442695
  %v676 = vpow.pop %v675
  %v677 = vmul.f32 %v561, 1.442695
  %v678 = vpow.pop %v677
  %v679 = vmul.f32 %v562, 1.442695
  %v680 = vpow.pop %v679
  %v681 = vmul.f32 %v563, 1.442695
  %v682 = vpow.pop %v681
  %v683 = vmul.f32 %v564, 1.442695
  %v684 = vpow.pop %v683
  %v685 = vmul.f32 %v565, 1.442695
  %v686 = vpow.pop %v685
  %v687 = vmul.f32 %v566, 1.442695
  %v688 = vpow.pop %v687
  %v689 = vmul.f32 %v567, 1.442695
  %v690 = vpow.pop %v689
  %v691 = vmul.f32 %v568, 1.442695
  %v692 = vpow.pop %v691
  %v693 = vmul.f32 %v569, 1.442695
  %v694 = vpow.pop %v693
  %v695 = vmul.f32 %v570, 1.442695
  %v696 = vpow.pop %v695
  %v697 = vmul.f32 %v571, 1.442695
  %v698 = vpow.pop %v697
  %v699 = vmul.f32 %v572, 1.442695
  %v700 = vpow.pop %v699
  %v701 = vadd.f32 %v574, 1.0
  %v702 = vadd.f32 %v576, 1.0
  %v703 = vadd.f32 %v578, 1.0
  %v704 = vadd.f32 %v580, 1.0
  %v705 = vadd.f32 %v582, 1.0
  %v706 = vadd.f32 %v584, 1.0
  %v707 = vadd.f32 %v586, 1.0
  %v708 = vadd.f32 %v588, 1.0
  %v709 = vadd.f32 %v590, 1.0
  %v710 = vadd.f32 %v592, 1.0
  %v711 = vadd.f32 %v594, 1.0
  %v712 = vadd.f32 %v596, 1.0
  %v713 = vadd.f32 %v598, 1.0
  %v714 = vadd.f32 %v600, 1.0
  %v715 = vadd.f32 %v602, 1.0
  %v716 = vadd.f32 %v604, 1.0
  %v717 = vadd.f32 %v606, 1.0
  %v718 = vadd.f32 %v608, 1.0
  %v719 = vadd.f32 %v610, 1.0
  %v720 = vadd.f32 %v612, 1.0
  %v721 = vadd.f32 %v614, 1.0
  %v722 = vadd.f32 %v616, 1.0
  %v723 = vadd.f32 %v618, 1.0
  %v724 = vadd.f32 %v620, 1.0
  %v725 = vadd.f32 %v622, 1.0
  %v726 = vadd.f32 %v624, 1.0
  %v727 = vadd.f32 %v626, 1.0
  %v728 = vadd.f32 %v628, 1.0
  %v729 = vadd.f32 %v630, 1.0
  %v730 = vadd.f32 %v632, 1.0
  %v731 = vadd.f32 %v634, 1.0
  %v732 = vadd.f32 %v636, 1.0
  %v733 = vadd.f32 %v638, 1.0
  %v734 = vadd.f32 %v640, 1.0
  %v735 = vadd.f32 %v642, 1.0
  %v736 = vadd.f32 %v644, 1.0
  %v737 = vadd.f32 %v646, 1.0
  %v738 = vadd.f32 %v648, 1.0
  %v739 = vadd.f32 %v650, 1.0
  %v740 = vadd.f32 %v652, 1.0
  %v741 = vadd.f32 %v654, 1.0
  %v742 = vadd.f32 %v656, 1.0
  %v743 = vadd.f32 %v658, 1.0
  %v744 = vadd.f32 %v660, 1.0
  %v745 = vadd.f32 %v662, 1.0
  %v746 = vadd.f32 %v664, 1.0
  %v747 = vadd.f32 %v666, 1.0
  %v748 = vadd.f32 %v668, 1.0
  %v749 = vadd.f32 %v670, 1.0
  %v750 = vadd.f32 %v672, 1.0
  %v751 = vadd.f32 %v674, 1.0
  %v752 = vadd.f32 %v676, 1.0
  %v753 = vadd.f32 %v678, 1.0
  %v754 = vadd.f32 %v680, 1.0
  %v755 = vadd.f32 %v682, 1.0
  %v756 = vadd.f32 %v684, 1.0
  %v757 = vadd.f32 %v686, 1.0
  %v758 = vadd.f32 %v688, 1.0
  %v759 = vadd.f32 %v690, 1.0
  %v760 = vadd.f32 %v692, 1.0
  %v761 = vadd.f32 %v694, 1.0
  %v762 = vadd.f32 %v696, 1.0
  %v763 = vadd.f32 %v698, 1.0
  %v764 = vadd.f32 %v700, 1.0
  %v765 = vrcp.pop %v701
  %v766 = vmul.f32 1.0, %v765
  %v767 = vrcp.pop %v702
  %v768 = vmul.f32 1.0, %v767
  %v769 = vrcp.pop %v703
  %v770 = vmul.f32 1.0, %v769
  %v771 = vrcp.pop %v704
  %v772 = vmul.f32 1.0, %v771
  %v773 = vrcp.pop %v705
  %v774 = vmul.f32 1.0, %v773
  %v775 = vrcp.pop %v706
  %v776 = vmul.f32 1.0, %v775
  %v777 = vrcp.pop %v707
  %v778 = vmul.f32 1.0, %v777
  %v779 = vrcp.pop %v708
  %v780 = vmul.f32 1.0, %v779
  %v781 = vrcp.pop %v709
  %v782 = vmul.f32 1.0, %v781
  %v783 = vrcp.pop %v710
  %v784 = vmul.f32 1.0, %v783
  %v785 = vrcp.pop %v711
  %v786 = vmul.f32 1.0, %v785
  %v787 = vrcp.pop %v712
  %v788 = vmul.f32 1.0, %v787
  %v789 = vrcp.pop %v713
  %v790 = vmul.f32 1.0, %v789
  %v791 = vrcp.pop %v714
  %v792 = vmul.f32 1.0, %v791
  %v793 = vrcp.pop %v715
  %v794 = vmul.f32 1.0, %v793
  %v795 = vrcp.pop %v716
  %v796 = vmul.f32 1.0, %v795
  %v797 = vrcp.pop %v717
  %v798 = vmul.f32 1.0, %v797
  %v799 = vrcp.pop %v718
  %v800 = vmul.f32 1.0, %v799
  %v801 = vrcp.pop %v719
  %v802 = vmul.f32 1.0, %v801
  %v803 = vrcp.pop %v720
  %v804 = vmul.f32 1.0, %v803
  %v805 = vrcp.pop %v721
  %v806 = vmul.f32 1.0, %v805
  %v807 = vrcp.pop %v722
  %v808 = vmul.f32 1.0, %v807
  %v809 = vrcp.pop %v723
  %v810 = vmul.f32 1.0, %v809
  %v811 = vrcp.pop %v724
  %v812 = vmul.f32 1.0, %v811
  %v813 = vrcp.pop %v725
  %v814 = vmul.f32 1.0, %v813
  %v815 = vrcp.pop %v726
  %v816 = vmul.f32 1.0, %v815
  %v817 = vrcp.pop %v727
  %v818 = vmul.f32 1.0, %v817
  %v819 = vrcp.pop %v728
  %v820 = vmul.f32 1.0, %v819
  %v821 = vrcp.pop %v729
  %v822 = vmul.f32 1.0, %v821
  %v823 = vrcp.pop %v730
  %v824 = vmul.f32 1.0, %v823
  %v825 = vrcp.pop %v731
  %v826 = vmul.f32 1.0, %v825
  %v827 = vrcp.pop %v732
  %v828 = vmul.f32 1.0, %v827
  %v829 = vrcp.pop %v733
  %v830 = vmul.f32 1.0, %v829
  %v831 = vrcp.pop %v734
  %v832 = vmul.f32 1.0, %v831
  %v833 = vrcp.pop %v735
  %v834 = vmul.f32 1.0, %v833
  %v835 = vrcp.pop %v736
  %v836 = vmul.f32 1.0, %v835
  %v837 = vrcp.pop %v737
  %v838 = vmul.f32 1.0, %v837
  %v839 = vrcp.pop %v738
  %v840 = vmul.f32 1.0, %v839
  %v841 = vrcp.pop %v739
  %v842 = vmul.f32 1.0, %v841
  %v843 = vrcp.pop %v740
  %v844 = vmul.f32 1.0, %v843
  %v845 = vrcp.pop %v741
  %v846 = vmul.f32 1.0, %v845
  %v847 = vrcp.pop %v742
  %v848 = vmul.f32 1.0, %v847
  %v849 = vrcp.pop %v743
  %v850 = vmul.f32 1.0, %v849
  %v851 = vrcp.pop %v744
  %v852 = vmul.f32 1.0, %v851
  %v853 = vrcp.pop %v745
  %v854 = vmul.f32 1.0, %v853
  %v855 = vrcp.pop %v746
  %v856 = vmul.f32 1.0, %v855
  %v857 = vrcp.pop %v747
  %v858 = vmul.f32 1.0, %v857
  %v859 = vrcp.pop %v748
  %v860 = vmul.f32 1.0, %v859
  %v861 = vrcp.pop %v749
  %v862 = vmul.f32 1.0, %v861
  %v863 = vrcp.pop %v750
  %v864 = vmul.f32 1.0, %v863
  %v865 = vrcp.pop %v751
  %v866 = vmul.f32 1.0, %v865
  %v867 = vrcp.pop %v752
  %v868 = vmul.f32 1.0, %v867
  %v869 = vrcp.pop %v753
  %v870 = vmul.f32 1.0, %v869
  %v871 = vrcp.pop %v754
  %v872 = vmul.f32 1.0, %v871
  %v873 = vrcp.pop %v755
  %v874 = vmul.f32 1.0, %v873
  %v875 = vrcp.pop %v756
  %v876 = vmul.f32 1.0, %v875
  %v877 = vrcp.pop %v757
  %v878 = vmul.f32 1.0, %v877
  %v879 = vrcp.pop %v758
  %v880 = vmul.f32 1.0, %v879
  %v881 = vrcp.pop %v759
  %v882 = vmul.f32 1.0, %v881
  %v883 = vrcp.pop %v760
  %v884 = vmul.f32 1.0, %v883
  %v885 = vrcp.pop %v761
  %v886 = vmul.f32 1.0, %v885
  %v887 = vrcp.pop %v762
  %v888 = vmul.f32 1.0, %v887
  %v889 = vrcp.pop %v763
  %v890 = vmul.f32 1.0, %v889
  %v891 = vrcp.pop %v764
  %v892 = vmul.f32 1.0, %v891
  %v893 = vmul.f32 %v255, %v766
  %v894 = vmul.f32 %v258, %v768
  %v895 = vmul.f32 %v263, %v770
  %v896 = vmul.f32 %v266, %v772
  %v897 = vmul.f32 %v271, %v774
  %v898 = vmul.f32 %v274, %v776
  %v899 = vmul.f32 %v279, %v778
  %v900 = vmul.f32 %v282, %v780
  %v901 = vmul.f32 %v287, %v782
  %v902 = vmul.f32 %v290, %v784
  %v903 = vmul.f32 %v295, %v786
  %v904 = vmul.f32 %v298, %v788
  %v905 = vmul.f32 %v303, %v790
  %v906 = vmul.f32 %v306, %v792
  %v907 = vmul.f32 %v311, %v794
  %v908 = vmul.f32 %v314, %v796
  %v909 = vmul.f32 %v319, %v798
  %v910 = vmul.f32 %v322, %v800
  %v911 = vmul.f32 %v327, %v802
  %v912 = vmul.f32 %v330, %v804
  %v913 = vmul.f32 %v335, %v806
  %v914 = vmul.f32 %v338, %v808
  %v915 = vmul.f32 %v343, %v810
  %v916 = vmul.f32 %v346, %v812
  %v917 = vmul.f32 %v351, %v814
  %v918 = vmul.f32 %v354, %v816
  %v919 = vmul.f32 %v359, %v818
  %v920 = vmul.f32 %v362, %v820
  %v921 = vmul.f32 %v367, %v822
  %v922 = vmul.f32 %v370, %v824
  %v923 = vmul.f32 %v375, %v826
  %v924 = vmul.f32 %v378, %v828
  %v925 = vmul.f32 %v383, %v830
  %v926 = vmul.f32 %v386, %v832
  %v927 = vmul.f32 %v391, %v834
  %v928 = vmul.f32 %v394, %v836
  %v929 = vmul.f32 %v399, %v838
  %v930 = vmul.f32 %v402, %v840
  %v931 = vmul.f32 %v407, %v842
  %v932 = vmul.f32 %v410, %v844
  %v933 = vmul.f32 %v415, %v846
  %v934 = vmul.f32 %v418, %v848
  %v935 = vmul.f32 %v423, %v850
  %v936 = vmul.f32 %v426, %v852
  %v937 = vmul.f32 %v431, %v854
  %v938 = vmul.f32 %v434, %v856
  %v939 = vmul.f32 %v439, %v858
  %v940 = vmul.f32 %v442, %v860
  %v941 = vmul.f32 %v447, %v862
  %v942 = vmul.f32 %v450, %v864
  %v943 = vmul.f32 %v455, %v866
  %v944 = vmul.f32 %v458, %v868
  %v945 = vmul.f32 %v463, %v870
  %v946 = vmul.f32 %v466, %v872
  %v947 = vmul.f32 %v471, %v874
  %v948 = vmul.f32 %v474, %v876
  %v949 = vmul.f32 %v479, %v878
  %v950 = vmul.f32 %v482, %v880
  %v951 = vmul.f32 %v487, %v882
  %v952 = vmul.f32 %v490, %v884
  %v953 = vmul.f32 %v495, %v886
  %v954 = vmul.f32 %v498, %v888
  %v955 = vmul.f32 %v503, %v890
  %v956 = vmul.f32 %v506, %v892
  %v957 = vpack.c.bf16 %v894, %v893
  %v958 = vpack.c.bf16 %v896, %v895
  %v959 = vpack.c.bf16 %v898, %v897
  %v960 = vpack.c.bf16 %v900, %v899
  %v961 = vpack.c.bf16 %v902, %v901
  %v962 = vpack.c.bf16 %v904, %v903
  %v963 = vpack.c.bf16 %v906, %v905
  %v964 = vpack.c.bf16 %v908, %v907
  %v965 = vpack.c.bf16 %v910, %v909
  %v966 = vpack.c.bf16 %v912, %v911
  %v967 = vpack.c.bf16 %v914, %v913
  %v968 = vpack.c.bf16 %v916, %v915
  %v969 = vpack.c.bf16 %v918, %v917
  %v970 = vpack.c.bf16 %v920, %v919
  %v971 = vpack.c.bf16 %v922, %v921
  %v972 = vpack.c.bf16 %v924, %v923
  %v973 = vpack.c.bf16 %v926, %v925
  %v974 = vpack.c.bf16 %v928, %v927
  %v975 = vpack.c.bf16 %v930, %v929
  %v976 = vpack.c.bf16 %v932, %v931
  %v977 = vpack.c.bf16 %v934, %v933
  %v978 = vpack.c.bf16 %v936, %v935
  %v979 = vpack.c.bf16 %v938, %v937
  %v980 = vpack.c.bf16 %v940, %v939
  %v981 = vpack.c.bf16 %v942, %v941
  %v982 = vpack.c.bf16 %v944, %v943
  %v983 = vpack.c.bf16 %v946, %v945
  %v984 = vpack.c.bf16 %v948, %v947
  %v985 = vpack.c.bf16 %v950, %v949
  %v986 = vpack.c.bf16 %v952, %v951
  %v987 = vpack.c.bf16 %v954, %v953
  %v988 = vpack.c.bf16 %v956, %v955
  %v1021 = vunpack.c.l.b16 %v957
  %v1022 = vunpack.c.h.b16 %v957
  %v1023 = vunpack.c.l.b16 %v958
  %v1024 = vunpack.c.h.b16 %v958
  %v1025 = vunpack.c.l.b16 %v959
  %v1026 = vunpack.c.h.b16 %v959
  %v1027 = vunpack.c.l.b16 %v960
  %v1028 = vunpack.c.h.b16 %v960
  %v1029 = vunpack.c.l.b16 %v961
  %v1030 = vunpack.c.h.b16 %v961
  %v1031 = vunpack.c.l.b16 %v962
  %v1032 = vunpack.c.h.b16 %v962
  %v1033 = vunpack.c.l.b16 %v963
  %v1034 = vunpack.c.h.b16 %v963
  %v1035 = vunpack.c.l.b16 %v964
  %v1036 = vunpack.c.h.b16 %v964
  %v1037 = vunpack.c.l.b16 %v965
  %v1038 = vunpack.c.h.b16 %v965
  %v1039 = vunpack.c.l.b16 %v966
  %v1040 = vunpack.c.h.b16 %v966
  %v1041 = vunpack.c.l.b16 %v967
  %v1042 = vunpack.c.h.b16 %v967
  %v1043 = vunpack.c.l.b16 %v968
  %v1044 = vunpack.c.h.b16 %v968
  %v1045 = vunpack.c.l.b16 %v969
  %v1046 = vunpack.c.h.b16 %v969
  %v1047 = vunpack.c.l.b16 %v970
  %v1048 = vunpack.c.h.b16 %v970
  %v1049 = vunpack.c.l.b16 %v971
  %v1050 = vunpack.c.h.b16 %v971
  %v1051 = vunpack.c.l.b16 %v972
  %v1052 = vunpack.c.h.b16 %v972
  %v1053 = vunpack.c.l.b16 %v973
  %v1054 = vunpack.c.h.b16 %v973
  %v1055 = vunpack.c.l.b16 %v974
  %v1056 = vunpack.c.h.b16 %v974
  %v1057 = vunpack.c.l.b16 %v975
  %v1058 = vunpack.c.h.b16 %v975
  %v1059 = vunpack.c.l.b16 %v976
  %v1060 = vunpack.c.h.b16 %v976
  %v1061 = vunpack.c.l.b16 %v977
  %v1062 = vunpack.c.h.b16 %v977
  %v1063 = vunpack.c.l.b16 %v978
  %v1064 = vunpack.c.h.b16 %v978
  %v1065 = vunpack.c.l.b16 %v979
  %v1066 = vunpack.c.h.b16 %v979
  %v1067 = vunpack.c.l.b16 %v980
  %v1068 = vunpack.c.h.b16 %v980
  %v1069 = vunpack.c.l.b16 %v981
  %v1070 = vunpack.c.h.b16 %v981
  %v1071 = vunpack.c.l.b16 %v982
  %v1072 = vunpack.c.h.b16 %v982
  %v1073 = vunpack.c.l.b16 %v983
  %v1074 = vunpack.c.h.b16 %v983
  %v1075 = vunpack.c.l.b16 %v984
  %v1076 = vunpack.c.h.b16 %v984
  %v1077 = vunpack.c.l.b16 %v985
  %v1078 = vunpack.c.h.b16 %v985
  %v1079 = vunpack.c.l.b16 %v986
  %v1080 = vunpack.c.h.b16 %v986
  %v1081 = vunpack.c.l.b16 %v987
  %v1082 = vunpack.c.h.b16 %v987
  %v1083 = vunpack.c.l.b16 %v988
  %v1084 = vunpack.c.h.b16 %v988
  %v1085 = vpack.c.b16 %v1021, %v1021
  %v1086 = vpack.c.b16 %v1022, %v1022
  %v1087 = vpack.c.b16 %v1023, %v1023
  %v1088 = vpack.c.b16 %v1024, %v1024
  %v1089 = vpack.c.b16 %v1025, %v1025
  %v1090 = vpack.c.b16 %v1026, %v1026
  %v1091 = vpack.c.b16 %v1027, %v1027
  %v1092 = vpack.c.b16 %v1028, %v1028
  %v1093 = vpack.c.b16 %v1029, %v1029
  %v1094 = vpack.c.b16 %v1030, %v1030
  %v1095 = vpack.c.b16 %v1031, %v1031
  %v1096 = vpack.c.b16 %v1032, %v1032
  %v1097 = vpack.c.b16 %v1033, %v1033
  %v1098 = vpack.c.b16 %v1034, %v1034
  %v1099 = vpack.c.b16 %v1035, %v1035
  %v1100 = vpack.c.b16 %v1036, %v1036
  %v1101 = vpack.c.b16 %v1037, %v1037
  %v1102 = vpack.c.b16 %v1038, %v1038
  %v1103 = vpack.c.b16 %v1039, %v1039
  %v1104 = vpack.c.b16 %v1040, %v1040
  %v1105 = vpack.c.b16 %v1041, %v1041
  %v1106 = vpack.c.b16 %v1042, %v1042
  %v1107 = vpack.c.b16 %v1043, %v1043
  %v1108 = vpack.c.b16 %v1044, %v1044
  %v1109 = vpack.c.b16 %v1045, %v1045
  %v1110 = vpack.c.b16 %v1046, %v1046
  %v1111 = vpack.c.b16 %v1047, %v1047
  %v1112 = vpack.c.b16 %v1048, %v1048
  %v1113 = vpack.c.b16 %v1049, %v1049
  %v1114 = vpack.c.b16 %v1050, %v1050
  %v1115 = vpack.c.b16 %v1051, %v1051
  %v1116 = vpack.c.b16 %v1052, %v1052
  %v1117 = vpack.c.b16 %v1053, %v1053
  %v1118 = vpack.c.b16 %v1054, %v1054
  %v1119 = vpack.c.b16 %v1055, %v1055
  %v1120 = vpack.c.b16 %v1056, %v1056
  %v1121 = vpack.c.b16 %v1057, %v1057
  %v1122 = vpack.c.b16 %v1058, %v1058
  %v1123 = vpack.c.b16 %v1059, %v1059
  %v1124 = vpack.c.b16 %v1060, %v1060
  %v1125 = vpack.c.b16 %v1061, %v1061
  %v1126 = vpack.c.b16 %v1062, %v1062
  %v1127 = vpack.c.b16 %v1063, %v1063
  %v1128 = vpack.c.b16 %v1064, %v1064
  %v1129 = vpack.c.b16 %v1065, %v1065
  %v1130 = vpack.c.b16 %v1066, %v1066
  %v1131 = vpack.c.b16 %v1067, %v1067
  %v1132 = vpack.c.b16 %v1068, %v1068
  %v1133 = vpack.c.b16 %v1069, %v1069
  %v1134 = vpack.c.b16 %v1070, %v1070
  %v1135 = vpack.c.b16 %v1071, %v1071
  %v1136 = vpack.c.b16 %v1072, %v1072
  %v1137 = vpack.c.b16 %v1073, %v1073
  %v1138 = vpack.c.b16 %v1074, %v1074
  %v1139 = vpack.c.b16 %v1075, %v1075
  %v1140 = vpack.c.b16 %v1076, %v1076
  %v1141 = vpack.c.b16 %v1077, %v1077
  %v1142 = vpack.c.b16 %v1078, %v1078
  %v1143 = vpack.c.b16 %v1079, %v1079
  %v1144 = vpack.c.b16 %v1080, %v1080
  %v1145 = vpack.c.b16 %v1081, %v1081
  %v1146 = vpack.c.b16 %v1082, %v1082
  %v1147 = vpack.c.b16 %v1083, %v1083
  %v1148 = vpack.c.b16 %v1084, %v1084
  %vm1213 = vcmask 60416
  %1214 = vst.msk [vmem:[%s3] sm:$0xf] %vm1213, %v1085
  %1215 = vst.msk [vmem:[%s3 + $0x4] sm:$0xf] %vm1213, %v1086
  %1216 = vst.msk [vmem:[%s3 + $0x8] sm:$0xf] %vm1213, %v1087
  %1217 = vst.msk [vmem:[%s3 + $0xc] sm:$0xf] %vm1213, %v1088
  %1218 = vst.msk [vmem:[%s3 + $0x10] sm:$0xf] %vm1213, %v1089
  %1219 = vst.msk [vmem:[%s3 + $0x14] sm:$0xf] %vm1213, %v1090
  %1220 = vst.msk [vmem:[%s3 + $0x18] sm:$0xf] %vm1213, %v1091
  %1221 = vst.msk [vmem:[%s3 + $0x1c] sm:$0xf] %vm1213, %v1092
  %1222 = vst.msk [vmem:[%s3 + $0x20] sm:$0xf] %vm1213, %v1093
  %1223 = vst.msk [vmem:[%s3 + $0x24] sm:$0xf] %vm1213, %v1094
  %1224 = vst.msk [vmem:[%s3 + $0x28] sm:$0xf] %vm1213, %v1095
  %1225 = vst.msk [vmem:[%s3 + $0x2c] sm:$0xf] %vm1213, %v1096
  %1226 = vst.msk [vmem:[%s3 + $0x30] sm:$0xf] %vm1213, %v1097
  %1227 = vst.msk [vmem:[%s3 + $0x34] sm:$0xf] %vm1213, %v1098
  %1228 = vst.msk [vmem:[%s3 + $0x38] sm:$0xf] %vm1213, %v1099
  %1229 = vst.msk [vmem:[%s3 + $0x3c] sm:$0xf] %vm1213, %v1100
  %1230 = vst.msk [vmem:[%s3 + $0x40] sm:$0xf] %vm1213, %v1101
  %1231 = vst.msk [vmem:[%s3 + $0x44] sm:$0xf] %vm1213, %v1102
  %1232 = vst.msk [vmem:[%s3 + $0x48] sm:$0xf] %vm1213, %v1103
  %1233 = vst.msk [vmem:[%s3 + $0x4c] sm:$0xf] %vm1213, %v1104
  %1234 = vst.msk [vmem:[%s3 + $0x50] sm:$0xf] %vm1213, %v1105
  %1235 = vst.msk [vmem:[%s3 + $0x54] sm:$0xf] %vm1213, %v1106
  %1236 = vst.msk [vmem:[%s3 + $0x58] sm:$0xf] %vm1213, %v1107
  %1237 = vst.msk [vmem:[%s3 + $0x5c] sm:$0xf] %vm1213, %v1108
  %1238 = vst.msk [vmem:[%s3 + $0x60] sm:$0xf] %vm1213, %v1109
  %1239 = vst.msk [vmem:[%s3 + $0x64] sm:$0xf] %vm1213, %v1110
  %1240 = vst.msk [vmem:[%s3 + $0x68] sm:$0xf] %vm1213, %v1111
  %1241 = vst.msk [vmem:[%s3 + $0x6c] sm:$0xf] %vm1213, %v1112
  %1242 = vst.msk [vmem:[%s3 + $0x70] sm:$0xf] %vm1213, %v1113
  %1243 = vst.msk [vmem:[%s3 + $0x74] sm:$0xf] %vm1213, %v1114
  %1244 = vst.msk [vmem:[%s3 + $0x78] sm:$0xf] %vm1213, %v1115
  %1245 = vst.msk [vmem:[%s3 + $0x7c] sm:$0xf] %vm1213, %v1116
  %1246 = vst.msk [vmem:[%s3 + $0x80] sm:$0xf] %vm1213, %v1117
  %1247 = vst.msk [vmem:[%s3 + $0x84] sm:$0xf] %vm1213, %v1118
  %1248 = vst.msk [vmem:[%s3 + $0x88] sm:$0xf] %vm1213, %v1119
  %1249 = vst.msk [vmem:[%s3 + $0x8c] sm:$0xf] %vm1213, %v1120
  %1250 = vst.msk [vmem:[%s3 + $0x90] sm:$0xf] %vm1213, %v1121
  %1251 = vst.msk [vmem:[%s3 + $0x94] sm:$0xf] %vm1213, %v1122
  %1252 = vst.msk [vmem:[%s3 + $0x98] sm:$0xf] %vm1213, %v1123
  %1253 = vst.msk [vmem:[%s3 + $0x9c] sm:$0xf] %vm1213, %v1124
  %1254 = vst.msk [vmem:[%s3 + $0xa0] sm:$0xf] %vm1213, %v1125
  %1255 = vst.msk [vmem:[%s3 + $0xa4] sm:$0xf] %vm1213, %v1126
  %1256 = vst.msk [vmem:[%s3 + $0xa8] sm:$0xf] %vm1213, %v1127
  %1257 = vst.msk [vmem:[%s3 + $0xac] sm:$0xf] %vm1213, %v1128
  %1258 = vst.msk [vmem:[%s3 + $0xb0] sm:$0xf] %vm1213, %v1129
  %1259 = vst.msk [vmem:[%s3 + $0xb4] sm:$0xf] %vm1213, %v1130
  %1260 = vst.msk [vmem:[%s3 + $0xb8] sm:$0xf] %vm1213, %v1131
  %1261 = vst.msk [vmem:[%s3 + $0xbc] sm:$0xf] %vm1213, %v1132
  %1262 = vst.msk [vmem:[%s3 + $0xc0] sm:$0xf] %vm1213, %v1133
  %1263 = vst.msk [vmem:[%s3 + $0xc4] sm:$0xf] %vm1213, %v1134
  %1264 = vst.msk [vmem:[%s3 + $0xc8] sm:$0xf] %vm1213, %v1135
  %1265 = vst.msk [vmem:[%s3 + $0xcc] sm:$0xf] %vm1213, %v1136
  %1266 = vst.msk [vmem:[%s3 + $0xd0] sm:$0xf] %vm1213, %v1137
  %1267 = vst.msk [vmem:[%s3 + $0xd4] sm:$0xf] %vm1213, %v1138
  %1268 = vst.msk [vmem:[%s3 + $0xd8] sm:$0xf] %vm1213, %v1139
  %1269 = vst.msk [vmem:[%s3 + $0xdc] sm:$0xf] %vm1213, %v1140
  %1270 = vst.msk [vmem:[%s3 + $0xe0] sm:$0xf] %vm1213, %v1141
  %1271 = vst.msk [vmem:[%s3 + $0xe4] sm:$0xf] %vm1213, %v1142
  %1272 = vst.msk [vmem:[%s3 + $0xe8] sm:$0xf] %vm1213, %v1143
  %1273 = vst.msk [vmem:[%s3 + $0xec] sm:$0xf] %vm1213, %v1144
  %1274 = vst.msk [vmem:[%s3 + $0xf0] sm:$0xf] %vm1213, %v1145
  %1275 = vst.msk [vmem:[%s3 + $0xf4] sm:$0xf] %vm1213, %v1146
  %1276 = vst.msk [vmem:[%s3 + $0xf8] sm:$0xf] %vm1213, %v1147
  %1277 = vst.msk [vmem:[%s3 + $0xfc] sm:$0xf] %vm1213, %v1148
  // Predicated region
  $region14: #{tpu_custom_call.1} parent=0 // pred_check
    _
  $region15: #{tpu_custom_call.1} parent=0 // pred_check_branch
    %1279 = sbr.rel (0) target = $region17
  $region16: #{tpu_custom_call.1} parent=0 // pred_region
    _
  $region17: #{tpu_custom_call.1} parent=0 // pred_fallthru
    _
  // Predicated region
  $region18: #{tpu_custom_call.1} parent=0 // pred_check
    _
  $region19: #{tpu_custom_call.1} parent=0 // pred_check_branch
    %1281 = sbr.rel (0) target = $region21
  $region20: #{tpu_custom_call.1} parent=0 // pred_region
    _
  $region21: #{tpu_custom_call.1} parent=0 // pred_fallthru
    _

</llo_original>
